<compile_context>
chip_gen: v7x
topology: tpu7x:2x2x1
jax: 0.10.0
libtpu: 0.0.40
codegen_flags: <defaults>
</compile_context>

<pallas_src>
import math
import functools

import jax
import jax.numpy as jnp
from jax.experimental import pallas as pl
from jax.experimental.pallas import tpu as pltpu


# ---------------------------------------------------------------------------
# Parameter setup (plain JAX glue): sinusoidal PE table, exactly as PyTorch.
# ---------------------------------------------------------------------------
def make_positional_encoding(d_model: int, max_len: int = 768) -> jnp.ndarray:
    position = jnp.arange(0, max_len, dtype=jnp.float32)[:, None]          # (L, 1)
    div_term = jnp.exp(
        jnp.arange(0, d_model, 2, dtype=jnp.float32) * (-math.log(10000.0) / d_model)
    )                                                                       # (D/2,)
    angles = position * div_term                                            # (L, D/2)
    pe = jnp.zeros((max_len, d_model), dtype=jnp.float32)
    pe = pe.at[:, 0::2].set(jnp.sin(angles))
    pe = pe.at[:, 1::2].set(jnp.cos(angles))
    return pe[:, None, :]                                                   # (L, 1, D)


# ---------------------------------------------------------------------------
# Kernels.  x/out tiles are (TS, B*D); the pe tile is (TS, D).
# ---------------------------------------------------------------------------
def _pe_add_kernel(x_ref, pe_ref, o_ref, *, batch, d_model, per_batch):
    if per_batch:
        # d_model % 128 == 0: per-batch lane-aligned chunk stores, no PE temp
        # the size of the x tile.
        pe_t = pe_ref[...]
        for b in range(batch):
            sl = slice(b * d_model, (b + 1) * d_model)
            o_ref[:, sl] = (x_ref[:, sl] + pe_t).astype(o_ref.dtype)
    else:
        # Small / unaligned d_model: tiny tiles, keep the simple tiled path.
        pe_b = jnp.tile(pe_ref[...], (1, batch))
        o_ref[...] = (x_ref[...] + pe_b).astype(o_ref.dtype)


def _pe_add_dropout_kernel(seed_ref, x_ref, pe_ref, o_ref, *, batch, d_model,
                           row_width, per_batch, threshold, scale):
    ts = x_ref.shape[0]

    if per_batch:
        cw, n_chunks = d_model, batch
        pe_t = pe_ref[...]
    else:
        cw, n_chunks = row_width, 1
        pe_t = jnp.tile(pe_ref[...], (1, batch))

    # Counter-based PRNG over the *global* flat element index (tile-invariant,
    # unique per element).  NOTE: the u32 index wraps for arrays with > 2^32
    # elements, which would repeat mask bits -- irrelevant at these sizes.
    # Seed is folded into the scalar base (zero per-element cost).
    base = pl.program_id(0).astype(jnp.uint32) * jnp.uint32(ts * row_width)
    base = base + seed_ref[0].astype(jnp.uint32) * jnp.uint32(0x9E3779B9)

    rows = jax.lax.broadcasted_iota(jnp.int32, (ts, cw), 0)
    cols = jax.lax.broadcasted_iota(jnp.int32, (ts, cw), 1)
    local = (rows * row_width + cols).astype(jnp.uint32)    # shared across chunks

    for c in range(n_chunks):
        sl = slice(c * cw, (c + 1) * cw)
        y = x_ref[:, sl] + pe_t
        idx = local + (base + jnp.uint32(c * cw))
        # Light 2-round mix (dropout does not need full murmur quality).
        h = idx * jnp.uint32(0x85EBCA6B)
        h = h ^ (h >> 16)
        h = h * jnp.uint32(0xC2B2AE35)
        h = h ^ (h >> 16)
        keep = h >= jnp.uint32(threshold)        # P(drop) = threshold / 2^32 = p
        o_ref[:, sl] = jnp.where(keep, y * jnp.float32(scale),
                                 jnp.float32(0.0)).astype(o_ref.dtype)


# ---------------------------------------------------------------------------
# Tiling helpers
# ---------------------------------------------------------------------------
def _choose_row_tile(seq_len, row_bytes, target_block_bytes=4 << 20, max_rows=4096):
    """Row tile: ~4 MiB per x block (double-buffered in+out+pe fits comfortably
    under a 40 MiB VMEM cap on every generation), a multiple of 8, and at
    least 2 grid steps when S allows it so ("parallel",) can use both v7x TCs.
    The grid uses pl.cdiv, so the tile does NOT need to divide seq_len."""
    if seq_len <= 8:
        return seq_len                              # full-extent block (tiny)
    budget_rows = max(8, target_block_bytes // max(row_bytes, 1))
    limit = min(seq_len, max_rows, budget_rows)
    if seq_len >= 16:
        limit = min(limit, max(8, seq_len // 2))    # >= 2 grid steps
    return max(8, (limit // 8) * 8)


# ---------------------------------------------------------------------------
# Wrapper
# ---------------------------------------------------------------------------
def positional_encoding_forward(x, pe_table, *, p=0.1, training=False, seed=0):
    """x: (S, B, D).  Returns x + pe[:S] (with inverted dropout if training)."""
    S, B, D = x.shape
    row_width = B * D
    x2 = x.reshape(S, row_width)              # free reshape (contiguous)
    pe2 = pe_table[:S].reshape(S, D)          # (S, D); batch broadcast in-kernel

    itemsize = jnp.dtype(x.dtype).itemsize
    ts = _choose_row_tile(S, row_width * itemsize)
    grid = (pl.cdiv(S, ts),)
    # Lane-dense chunk path only when D is a multiple of 128.  For small D
    # (e.g. the 32-wide demo config) the slab lane width B*D may be < 128, so
    # stores are masked -- acceptable at those sizes; real transformer
    # d_model >= 128 hits the fast path.
    per_batch = (D % 128 == 0)

    x_block = ts * row_width * itemsize
    pe_block = ts * D * jnp.dtype(pe2.dtype).itemsize
    vmem_need = 2 * (2 * x_block + pe_block)  # double-buffered x + out + pe
    vmem_limit = int(min(40 << 20, max(vmem_need + (8 << 20), 20 << 20)))
    compiler_params = pltpu.CompilerParams(
        dimension_semantics=("parallel",),
        vmem_limit_bytes=vmem_limit,
    )
    out_shape = jax.ShapeDtypeStruct((S, row_width), x.dtype)

    if (not training) or p <= 0.0:
        out2 = pl.pallas_call(
            functools.partial(_pe_add_kernel, batch=B, d_model=D,
                              per_batch=per_batch),
            out_shape=out_shape,
            grid_spec=pltpu.PrefetchScalarGridSpec(
                num_scalar_prefetch=0,
                grid=grid,
                in_specs=[pl.BlockSpec((ts, row_width), lambda i: (i, 0)),
                          pl.BlockSpec((ts, D), lambda i: (i, 0))],
                out_specs=pl.BlockSpec((ts, row_width), lambda i: (i, 0)),
            ),
            compiler_params=compiler_params,
            input_output_aliases={0: 0},      # donate x into the output
        )(x2, pe2)
        return out2.reshape(S, B, D)

    if p >= 1.0:
        # Matches torch.nn.Dropout(p=1.0) in train mode: everything dropped.
        return jnp.zeros_like(x)

    threshold = min(int(round(p * 2.0 ** 32)), 2 ** 32 - 1)
    scale = 1.0 / (1.0 - p)
    seed_arr = jnp.asarray([seed], dtype=jnp.int32)
    kernel = functools.partial(_pe_add_dropout_kernel, batch=B, d_model=D,
                               row_width=row_width, per_batch=per_batch,
                               threshold=threshold, scale=scale)
    out2 = pl.pallas_call(
        kernel,
        out_shape=out_shape,
        grid_spec=pltpu.PrefetchScalarGridSpec(
            num_scalar_prefetch=1,            # seed lands in SMEM
            grid=grid,
            in_specs=[pl.BlockSpec((ts, row_width), lambda i, s: (i, 0)),
                      pl.BlockSpec((ts, D), lambda i, s: (i, 0))],
            out_specs=pl.BlockSpec((ts, row_width), lambda i, s: (i, 0)),
        ),
        compiler_params=compiler_params,
        input_output_aliases={1: 0},          # donate x (arg 1; seed is arg 0)
    )(seed_arr, x2, pe2)
    return out2.reshape(S, B, D)


# ---------------------------------------------------------------------------
# Main
# ---------------------------------------------------------------------------
if __name__ == "__main__":
    def _check(seq_len, batch, d_model, key):
        pe_table = make_positional_encoding(d_model, max_len=768)
        x = jax.random.normal(key, (seq_len, batch, d_model), dtype=jnp.float32)
        ref = x + pe_table[:seq_len]

        # Eval mode (dropout = identity): verify against pure-JAX reference.
        out_eval = jax.block_until_ready(
            positional_encoding_forward(x, pe_table, p=0.1, training=False))
        assert out_eval.shape == (seq_len, batch, d_model)
        assert jnp.allclose(out_eval, ref, atol=1e-6, rtol=1e-6), "eval mismatch"

        # Train mode (in-kernel inverted dropout, deterministic given the seed).
        p = 0.1
        out_train = jax.block_until_ready(
            positional_encoding_forward(x, pe_table, p=p, training=True, seed=0))
        assert out_train.shape == (seq_len, batch, d_model)
        kept = out_train != 0
        assert jnp.allclose(jnp.where(kept, out_train, 0.0),
                            jnp.where(kept, ref / (1.0 - p), 0.0),
                            atol=1e-5, rtol=1e-5), "train mismatch on kept elements"
        drop_rate = float(1.0 - jnp.mean(kept.astype(jnp.float32)))
        assert 0.0 < drop_rate < 0.5, f"suspicious drop rate {drop_rate}"

    key = jax.random.PRNGKey(0)
    k1, k2 = jax.random.split(key)
    # Spec-scale config (small d_model; exercises the tiled-PE fallback path).
    _check(seq_len=8, batch=2, d_model=32, key=k1)
    # Lane-aligned config (d_model % 128 == 0; exercises the per-batch chunk
    # path, a cdiv tail block, and a multi-step "parallel" grid).
    _check(seq_len=20, batch=2, d_model=128, key=k2)

    print("KERNEL_OK")
</pallas_src>

<mosaic_0001>
module attributes {stable_mosaic.version = 11 : i64} {
  func.func @_pe_add_kernel(%arg0: i32, %arg1: memref<8x64xf32, #tpu.memory_space<vmem>>, %arg2: memref<8x32xf32, #tpu.memory_space<vmem>>, %arg3: memref<8x64xf32, #tpu.memory_space<vmem>>) attributes {dimension_semantics = [#tpu.dimension_semantics<parallel>], iteration_bounds = array<i64: 1>, scalar_prefetch = 0 : i64, scratch_operands = 0 : i64, tpu.core_type = #tpu.core_type<tc>, window_params = [{transform_indices = @transform_0, window_bounds = array<i64: 8, 64>}, {transform_indices = @transform_1, window_bounds = array<i64: 8, 32>}, {transform_indices = @transform_2, window_bounds = array<i64: 8, 64>}]} {
    %c0 = arith.constant 0 : index
    %c0_0 = arith.constant 0 : index
    %0 = vector.load %arg2[%c0, %c0_0] : memref<8x32xf32, #tpu.memory_space<vmem>>, vector<8x32xf32>
    %1 = tpu.concatenate %0, %0 in 1 : vector<8x32xf32>, vector<8x32xf32> -> vector<8x64xf32>
    %c0_1 = arith.constant 0 : index
    %c0_2 = arith.constant 0 : index
    %2 = vector.load %arg1[%c0_1, %c0_2] : memref<8x64xf32, #tpu.memory_space<vmem>>, vector<8x64xf32>
    %3 = arith.addf %2, %1 : vector<8x64xf32>
    %c0_3 = arith.constant 0 : index
    %c0_4 = arith.constant 0 : index
    %4 = vector.load %arg3[%c0_3, %c0_4] : memref<8x64xf32, #tpu.memory_space<vmem>>, vector<8x64xf32>
    tpu.vector_store %arg3[%c0_3, %c0_4], %3 {strides = array<i32>} : memref<8x64xf32, #tpu.memory_space<vmem>>, vector<8x64xf32>,
    return
  }
  func.func @transform_0(%arg0: i32) -> (i32, i32) {
    %c0_i32 = arith.constant 0 : i32
    %c0_i32_0 = arith.constant 0 : i32
    return %arg0, %c0_i32 : i32, i32
  }
  func.func @transform_1(%arg0: i32) -> (i32, i32) {
    %c0_i32 = arith.constant 0 : i32
    %c0_i32_0 = arith.constant 0 : i32
    return %arg0, %c0_i32 : i32, i32
  }
  func.func @transform_2(%arg0: i32) -> (i32, i32) {
    %c0_i32 = arith.constant 0 : i32
    %c0_i32_0 = arith.constant 0 : i32
    return %arg0, %c0_i32 : i32, i32
  }
}

</mosaic_0001>

<llo_original>
// kernel: tpu_custom_call.1
$region0: #{tpu_custom_call.1}
  #allocation0 [shape = 'u32[]', space=smem, size = 0x4, offset = 0x4, fixed_abs, tag = 'smem constant byte address 0x4 - core index']
  #allocation1 [shape = 'u32[144,128]{1,0:T(1,128)}', space=vmem, size = 0x12000, scoped, tag = 'internal scratch']
  %s0 = inlined_call_operand.hbm [shape: f32[8,64], index: 0, kind: input, shape index: {}, may-alias: {0,2}]
  %s1 = inlined_call_operand.vmem [shape: f32[8,32], index: 1, kind: input, shape index: {}]
  %s2 = inlined_call_operand.hbm [shape: f32[8,64], index: 2, kind: output, shape index: {}, may-alias: {0,2}]
  %s3 = sld [smem:[#allocation0]]
  $region22: #{tpu_custom_call.1} parent=0
    _
  %s5 = ssub.s32 1, %s3
  %s6 = scalar_select 0, %s5, %s3
  $region1: #{tpu_custom_call.1} parent=0
    #allocation2 [shape = 'u8[4096]{0}', space=vmem, size = 0x1000, scoped, tag = 'input window, operand 0, single buffered']
    #allocation3 [shape = 's32[1]{0}', space=sflag, size = 0x4, scoped, tag = 'scoped memory for tpu_custom_call.1']
    #allocation4 [shape = 's32[1]{0}', space=sflag, size = 0x4, scoped, tag = 'scoped memory for tpu_custom_call.1']
    #allocation5 [shape = 'u8[4096]{0}', space=vmem, size = 0x1000, scoped, tag = 'output window, operand 0, single buffered']
    %7 = vsyncpa [#allocation3], 0
    %8 = vsyncpa [#allocation4], 0
    // Predicated region
    $region2: #{tpu_custom_call.1} parent=1 // pred_check
      _
    $region3: #{tpu_custom_call.1} parent=1 // pred_check_branch
      %10 = sbr.rel (0) target = $region5
    $region4: #{tpu_custom_call.1} parent=1 // pred_region
      %s12 = ssub.s32 128, 128
      %13 = vsyncadd [#allocation3], %s12
      %s15 = sshll.u32 [#allocation2], 4
      %s16 = int_to_ptr.vmem [resolvable:$true] %s15
      %18 = dma.hbm_to_vmem [thread:$0]  %s0, 128, %s16, [#allocation3]
    $region5: #{tpu_custom_call.1} parent=1 // pred_fallthru
      _
    // Predicated region
    $region6: #{tpu_custom_call.1} parent=1 // pred_check
      _
    $region7: #{tpu_custom_call.1} parent=1 // pred_check_branch
      %20 = sbr.rel (0) target = $region9
    $region8: #{tpu_custom_call.1} parent=1 // pred_region
      _
    $region9: #{tpu_custom_call.1} parent=1 // pred_fallthru
      _
    // Predicated region
    $region10: #{tpu_custom_call.1} parent=1 // pred_check
      _
    $region11: #{tpu_custom_call.1} parent=1 // pred_check_branch
      %22 = sbr.rel (0) target = $region13
    $region12: #{tpu_custom_call.1} parent=1 // pred_region
      %23 = dma.done [#allocation3], 128
    $region13: #{tpu_custom_call.1} parent=1 // pred_fallthru
      _
    %v24 = vld [vmem:[%s1] sm:$0xff]
    %26 = vrot.lane.b32.xlu0 %v24, 32
    %v27 = vpop.permute.xlu0 %26
    %vm29 = vcmask 261120
    %v30 = vsel %vm29, %v24, %v27
    %v31 = vld [vmem:[#allocation2] sm:$0xff]
    %v32 = vadd.f32 %v31, %v30
    %vm33 = vcmask 523264
    %34 = vst.msk [vmem:[#allocation5] sm:$0xff] %vm33, %v32
    // Predicated region
    $region14: #{tpu_custom_call.1} parent=1 // pred_check
      _
    $region15: #{tpu_custom_call.1} parent=1 // pred_check_branch
      %36 = sbr.rel (0) target = $region17
    $region16: #{tpu_custom_call.1} parent=1 // pred_region
      %s38 = ssub.s32 128, 128
      %39 = vsyncadd [#allocation4], %s38
      %s41 = sshll.u32 [#allocation5], 4
      %s42 = int_to_ptr.vmem [resolvable:$true] %s41
      %44 = dma.vmem_to_hbm [thread:$0]  %s42, 128, %s2, [#allocation4]
    $region17: #{tpu_custom_call.1} parent=1 // pred_fallthru
      _
    // Predicated region
    $region18: #{tpu_custom_call.1} parent=1 // pred_check
      _
    $region19: #{tpu_custom_call.1} parent=1 // pred_check_branch
      %46 = sbr.rel (0) target = $region21
    $region20: #{tpu_custom_call.1} parent=1 // pred_region
      %47 = dma.done [#allocation4], 128
    $region21: #{tpu_custom_call.1} parent=1 // pred_fallthru
      _
    %48 = vsyncpa [#allocation3], 1
    %49 = vsyncpa [#allocation4], 1

</llo_original>
